<compile_context>
chip_gen: v7x
topology: tpu7x:2x2x1
jax: 0.10.0
libtpu: 0.0.40
codegen_flags: <defaults>
</compile_context>

<pallas_src>
import functools

import jax
import jax.numpy as jnp
from jax import lax
from jax.experimental import pallas as pl
from jax.experimental.pallas import tpu as pltpu


# ----------------------------------------------------------------------------
# Fused ShuffleAttention kernel.
# ----------------------------------------------------------------------------
def _shuffle_attn_kernel(xa_ref, xb_ref, pa_ref, pb_ref, out_ref, *,
                         hw, eps, approx_sigmoid):
    """One tile of fused ShuffleAttention.

    xa_ref : (Bb, Cb, hw)   block of the first  c/2 channels (original order)
    xb_ref : (Bb, Cb, hw)   block of the second c/2 channels
    pa_ref : (3, Cb, 1)     unified gate params (p_elem, p_mean, p_bias) for xa
    pb_ref : (3, Cb, 1)     unified gate params for xb
    out_ref: (Bb, Cb, 2*hw) row k = [gated_xa[k] | gated_xb[k]], i.e. the
             channel-shuffled NCHW output viewed as (c/2, 2*h*w).
    """
    inv_hw = jnp.float32(1.0 / hw)

    def gated(x_ref, p_ref):
        x = x_ref[...].astype(jnp.float32)                   # (Bb, Cb, hw)
        p_elem = p_ref[0].astype(jnp.float32)                 # (Cb, 1)
        p_mean = p_ref[1].astype(jnp.float32)
        p_bias = p_ref[2].astype(jnp.float32)
        # One-pass spatial statistics (f32 accumulation, clamped variance).
        mean = jnp.sum(x, axis=-1, keepdims=True) * inv_hw
        msq = jnp.sum(x * x, axis=-1, keepdims=True) * inv_hw
        var = jnp.maximum(msq - mean * mean, 0.0)
        # gate = sigmoid(p_elem * GN(x) + p_mean * mean + p_bias)
        #      = sigmoid(a * x + b)  with per-channel scalars a, b:
        a = p_elem * lax.rsqrt(var + eps)                      # EUP rsqrt
        b = p_bias + p_mean * mean - a * mean
        arg = a * x + b
        denom = 1.0 + jnp.exp(-arg)                            # EUP exp
        if approx_sigmoid:
            gate = pl.reciprocal(denom, approx=True)           # EUP reciprocal
        else:
            gate = 1.0 / denom                                 # exact (verification)
        return (x * gate).astype(out_ref.dtype)

    # Two lane-aligned, unmasked stores realize the channel shuffle.
    out_ref[:, :, :hw] = gated(xa_ref, pa_ref)
    out_ref[:, :, hw:] = gated(xb_ref, pb_ref)


# ----------------------------------------------------------------------------
# Block picker: largest (batch_block, channel_block) tile that fits the per-step
# VMEM budget while keeping at least `min_grid_steps` pipeline steps.
# ----------------------------------------------------------------------------
def _pick_blocks(batch, c_half, hw, itemsize, *,
                 max_block_bytes=8 << 20, min_grid_steps=2, sublane=8):
    per_row = 4 * hw * itemsize            # xa + xb + out(2*hw) bytes per channel row
    cb_opts = [d for d in range(sublane, c_half + 1, sublane) if c_half % d == 0]
    if not cb_opts:
        cb_opts = [c_half]
    bb_opts = [d for d in range(1, batch + 1) if batch % d == 0]

    best = None       # fits cap AND has enough steps
    best_any = None   # fits cap only
    for cb in cb_opts:
        for bb in bb_opts:
            nbytes = per_row * cb * bb
            if nbytes > max_block_bytes:
                continue
            steps = (c_half // cb) * (batch // bb)
            key = (nbytes, cb, bb)         # max bytes, then widest channel block
            if best_any is None or key > best_any:
                best_any = key
            if steps >= min_grid_steps and (best is None or key > best):
                best = key
    chosen = best or best_any
    if chosen is None:                     # even a single channel row exceeds the cap
        return 1, cb_opts[0]
    _, cb, bb = chosen
    return bb, cb


# ----------------------------------------------------------------------------
# Host-side wrapper.
# ----------------------------------------------------------------------------
def shuffle_attention(x, params, *, groups, eps=1e-5, approx_sigmoid=True,
                      block=None, max_block_bytes=8 << 20, min_grid_steps=2,
                      vmem_limit_bytes=None):
    """ShuffleAttention forward.  x: (b, c, h, w) NCHW, matching the PyTorch module."""
    b, c, h, w = x.shape
    assert c % (2 * groups) == 0, "channels must be divisible by 2*groups"
    cpg = c // (2 * groups)                # channels per half-group
    c2 = c // 2
    hw = h * w
    itemsize = jnp.dtype(x.dtype).itemsize
    sublane = {4: 8, 2: 16, 1: 32}.get(itemsize, 8)
    # TODO(synk): c//2 not a multiple of the sublane packing needs an
    # unaligned-sublane fallback path; realistic configs all satisfy this.
    assert c2 % sublane == 0, "c // 2 must be a multiple of the sublane packing"
    # TODO(synk): hw not a multiple of 128 (e.g. 7x7 / 14x14 feature maps) needs a
    # padded/masked store path to keep the channel-shuffle stores lane-aligned.
    assert hw % 128 == 0, "h*w must be a multiple of 128 for lane-dense stores"

    f32 = jnp.float32
    cw = params['cweight'].reshape(cpg).astype(f32)
    cbv = params['cbias'].reshape(cpg).astype(f32)
    sw = params['sweight'].reshape(cpg).astype(f32)
    sbv = params['sbias'].reshape(cpg).astype(f32)
    gw = params['gn_weight'].reshape(cpg).astype(f32)
    gb = params['gn_bias'].reshape(cpg).astype(f32)

    # Unified per-channel gate: gate = sigmoid(p_elem*GN(x) + p_mean*mean(x) + p_bias)
    #   channel branch (j <  cpg): p_elem = 0         p_mean = cw[j]  p_bias = cb[j]
    #   spatial branch (j >= cpg): p_elem = sw*gw[j']  p_mean = 0      p_bias = sw*gb[j'] + sb[j']
    # with j = channel index mod 2*cpg (pattern repeats per group).
    zeros = jnp.zeros((cpg,), f32)
    p_elem = jnp.tile(jnp.concatenate([zeros, sw * gw]), groups)          # (c,)
    p_mean = jnp.tile(jnp.concatenate([cw, zeros]), groups)
    p_bias = jnp.tile(jnp.concatenate([cbv, sw * gb + sbv]), groups)
    pA = jnp.stack([p_elem[:c2], p_mean[:c2], p_bias[:c2]])[..., None]    # (3, c2, 1)
    pB = jnp.stack([p_elem[c2:], p_mean[c2:], p_bias[c2:]])[..., None]

    x3 = x.reshape(b, c, hw)               # free metadata reshape

    if block is None:
        b_blk, cb_blk = _pick_blocks(b, c2, hw, itemsize,
                                     max_block_bytes=max_block_bytes,
                                     min_grid_steps=min_grid_steps,
                                     sublane=sublane)
    else:
        b_blk, cb_blk = block
    n_cblk = c2 // cb_blk
    n_bblk = b // b_blk

    # Double-buffered footprint of the chosen block (+ params + slack headroom).
    per_step_bytes = 4 * hw * cb_blk * b_blk * itemsize
    if vmem_limit_bytes is None:
        vmem_limit_bytes = int(2 * per_step_bytes
                               + 2 * (pA.size + pB.size) * 4
                               + (4 << 20))

    kernel = functools.partial(_shuffle_attn_kernel, hw=hw, eps=eps,
                               approx_sigmoid=approx_sigmoid)
    out3 = pl.pallas_call(
        kernel,
        out_shape=jax.ShapeDtypeStruct((b, c2, 2 * hw), x.dtype),
        grid_spec=pltpu.PrefetchScalarGridSpec(
            num_scalar_prefetch=0,
            # Channel-block axis OUTERMOST so the tiny parameter blocks keep the
            # same block index across the inner batch axis (fetched n_cblk times
            # total instead of once per grid step).
            grid=(n_cblk, n_bblk),
            in_specs=[
                # x is passed twice; the two streams read disjoint channel
                # ranges, so the input is still read exactly once overall.
                pl.BlockSpec((b_blk, cb_blk, hw), lambda ci, bi: (bi, ci, 0)),
                pl.BlockSpec((b_blk, cb_blk, hw), lambda ci, bi: (bi, ci + n_cblk, 0)),
                pl.BlockSpec((3, cb_blk, 1), lambda ci, bi: (0, ci, 0)),
                pl.BlockSpec((3, cb_blk, 1), lambda ci, bi: (0, ci, 0)),
            ],
            out_specs=pl.BlockSpec((b_blk, cb_blk, 2 * hw),
                                   lambda ci, bi: (bi, ci, 0)),
        ),
        compiler_params=pltpu.CompilerParams(
            dimension_semantics=("parallel", "parallel"),
            vmem_limit_bytes=vmem_limit_bytes),
        cost_estimate=pl.CostEstimate(
            flops=10 * b * c * hw,
            transcendentals=b * c * hw,
            bytes_accessed=2 * b * c * hw * itemsize + (pA.size + pB.size) * 4),
    )(x3, x3, pA, pB)

    # (b, c/2, 2*hw) with row k = [out_ch 2k | out_ch 2k+1] IS the shuffled NCHW
    # channel order; reinterpreting it is free.
    return out3.reshape(b, c, h, w)


# ----------------------------------------------------------------------------
# Pure-JAX transcription of the PyTorch module (verification reference).
# ----------------------------------------------------------------------------
def shuffle_attention_ref(x, params, *, groups, eps=1e-5):
    b, c, h, w = x.shape
    cpg = c // (2 * groups)
    cw = params['cweight'].reshape(1, cpg, 1, 1)
    cb = params['cbias'].reshape(1, cpg, 1, 1)
    sw = params['sweight'].reshape(1, cpg, 1, 1)
    sb = params['sbias'].reshape(1, cpg, 1, 1)
    gw = params['gn_weight'].reshape(1, cpg, 1, 1)
    gb = params['gn_bias'].reshape(1, cpg, 1, 1)
    xg = x.reshape(b * groups, 2 * cpg, h, w)
    x0, x1 = xg[:, :cpg], xg[:, cpg:]
    pool = jnp.mean(x0, axis=(2, 3), keepdims=True)
    xn = x0 * jax.nn.sigmoid(cw * pool + cb)
    m = jnp.mean(x1, axis=(2, 3), keepdims=True)
    v = jnp.mean((x1 - m) ** 2, axis=(2, 3), keepdims=True)
    gn = (x1 - m) / jnp.sqrt(v + eps) * gw + gb
    xs = x1 * jax.nn.sigmoid(sw * gn + sb)
    out = jnp.concatenate([xn, xs], axis=1).reshape(b, c, h, w)
    out = out.reshape(b, 2, c // 2, h, w).transpose(0, 2, 1, 3, 4).reshape(b, c, h, w)
    return out


if __name__ == "__main__":
    key = jax.random.PRNGKey(0)
    k_x, k_cw, k_sw = jax.random.split(key, 3)

    batch, channels, height, width = 2, 64, 16, 16
    groups = 8                               # channels // (2*groups) = 4 (> 1)
    cpg = channels // (2 * groups)

    x = jax.random.normal(k_x, (batch, channels, height, width), jnp.float32)
    params = {
        'cweight': jax.random.uniform(k_cw, (1, cpg, 1, 1), jnp.float32, -0.5, 0.5),
        'cbias': jnp.ones((1, cpg, 1, 1), jnp.float32),
        'sweight': jax.random.uniform(k_sw, (1, cpg, 1, 1), jnp.float32, -0.5, 0.5),
        'sbias': jnp.ones((1, cpg, 1, 1), jnp.float32),
        'gn_weight': jnp.ones((cpg,), jnp.float32),
        'gn_bias': jnp.zeros((cpg,), jnp.float32),
    }

    ref = jax.block_until_ready(shuffle_attention_ref(x, params, groups=groups))

    # 1) exact-sigmoid f32 path: strict check of the fused math + shuffle.
    fwd_exact = jax.jit(functools.partial(shuffle_attention, groups=groups,
                                          approx_sigmoid=False))
    out = jax.block_until_ready(fwd_exact(x, params))
    assert out.shape == (batch, channels, height, width)
    assert bool(jnp.all(jnp.isfinite(out)))
    err = float(jnp.max(jnp.abs(out - ref)))
    assert err < 1e-4, f"exact path mismatch vs reference: max abs err = {err}"

    # 2) production path: approx reciprocal for the sigmoid (EUP slot).
    fwd = jax.jit(functools.partial(shuffle_attention, groups=groups))
    out_approx = jax.block_until_ready(fwd(x, params))
    err_approx = float(jnp.max(jnp.abs(out_approx - ref)))
    assert err_approx < 1e-2, f"approx path mismatch: max abs err = {err_approx}"

    # 3) bf16 storage path (halves HBM traffic on v6e/v7x); math stays f32.
    x_bf = x.astype(jnp.bfloat16)
    ref_bf = shuffle_attention_ref(x_bf.astype(jnp.float32), params, groups=groups)
    out_bf = jax.block_until_ready(fwd(x_bf, params))
    err_bf = float(jnp.max(jnp.abs(out_bf.astype(jnp.float32) - ref_bf)))
    assert out_bf.dtype == jnp.bfloat16
    assert err_bf < 8e-2, f"bf16 path mismatch: max abs err = {err_bf}"

    print("KERNEL_OK")
</pallas_src>

<mosaic_0001>
module attributes {stable_mosaic.version = 11 : i64} {
  func.func @_shuffle_attn_kernel(%arg0: i32, %arg1: i32, %arg2: memref<1x32x256xf32, #tpu.memory_space<vmem>>, %arg3: memref<1x32x256xf32, #tpu.memory_space<vmem>>, %arg4: memref<3x32x1xf32, #tpu.memory_space<vmem>>, %arg5: memref<3x32x1xf32, #tpu.memory_space<vmem>>, %arg6: memref<1x32x512xf32, #tpu.memory_space<vmem>>) attributes {dimension_semantics = [#tpu.dimension_semantics<parallel>, #tpu.dimension_semantics<parallel>], iteration_bounds = array<i64: 1, 2>, scalar_prefetch = 0 : i64, scratch_operands = 0 : i64, tpu.core_type = #tpu.core_type<tc>, window_params = [{transform_indices = @transform_0, window_bounds = array<i64: 1, 32, 256>}, {transform_indices = @transform_1, window_bounds = array<i64: 1, 32, 256>}, {transform_indices = @transform_2, window_bounds = array<i64: 3, 32, 1>}, {transform_indices = @transform_3, window_bounds = array<i64: 3, 32, 1>}, {transform_indices = @transform_4, window_bounds = array<i64: 1, 32, 512>}]} {
    %c0 = arith.constant 0 : index
    %c0_0 = arith.constant 0 : index
    %c0_1 = arith.constant 0 : index
    %0 = vector.load %arg2[%c0, %c0_0, %c0_1] : memref<1x32x256xf32, #tpu.memory_space<vmem>>, vector<1x32x256xf32>
    %c0_2 = arith.constant 0 : index
    %c0_3 = arith.constant 0 : index
    %c0_4 = arith.constant 0 : index
    %1 = vector.load %arg4[%c0_2, %c0_3, %c0_4] : memref<3x32x1xf32, #tpu.memory_space<vmem>>, vector<1x32x1xf32>
    %2 = vector.shape_cast %1 : vector<1x32x1xf32> to vector<32x1xf32>
    %c1 = arith.constant 1 : index
    %c0_5 = arith.constant 0 : index
    %c0_6 = arith.constant 0 : index
    %3 = vector.load %arg4[%c1, %c0_5, %c0_6] : memref<3x32x1xf32, #tpu.memory_space<vmem>>, vector<1x32x1xf32>
    %4 = vector.shape_cast %3 : vector<1x32x1xf32> to vector<32x1xf32>
    %c2 = arith.constant 2 : index
    %c0_7 = arith.constant 0 : index
    %c0_8 = arith.constant 0 : index
    %5 = vector.load %arg4[%c2, %c0_7, %c0_8] : memref<3x32x1xf32, #tpu.memory_space<vmem>>, vector<1x32x1xf32>
    %6 = vector.shape_cast %5 : vector<1x32x1xf32> to vector<32x1xf32>
    %cst = arith.constant dense<0.000000e+00> : vector<1x32xf32>
    %7 = vector.multi_reduction <add>, %0, %cst [2] : vector<1x32x256xf32> to vector<1x32xf32>
    %8 = vector.shape_cast %7 : vector<1x32xf32> to vector<1x32x1xf32>
    %cst_9 = arith.constant 3.906250e-03 : f32
    %9 = vector.broadcast %cst_9 : f32 to vector<1x32x1xf32>
    %10 = arith.mulf %8, %9 : vector<1x32x1xf32>
    %11 = arith.mulf %0, %0 : vector<1x32x256xf32>
    %cst_10 = arith.constant dense<0.000000e+00> : vector<1x32xf32>
    %12 = vector.multi_reduction <add>, %11, %cst_10 [2] : vector<1x32x256xf32> to vector<1x32xf32>
    %13 = vector.shape_cast %12 : vector<1x32xf32> to vector<1x32x1xf32>
    %cst_11 = arith.constant 3.906250e-03 : f32
    %14 = vector.broadcast %cst_11 : f32 to vector<1x32x1xf32>
    %15 = arith.mulf %13, %14 : vector<1x32x1xf32>
    %16 = arith.mulf %10, %10 : vector<1x32x1xf32>
    %17 = arith.subf %15, %16 : vector<1x32x1xf32>
    %cst_12 = arith.constant 0.000000e+00 : f32
    %18 = vector.broadcast %cst_12 : f32 to vector<1x32x1xf32>
    %19 = arith.maximumf %17, %18 : vector<1x32x1xf32>
    %cst_13 = arith.constant 9.99999974E-6 : f32
    %20 = vector.broadcast %cst_13 : f32 to vector<1x32x1xf32>
    %21 = arith.addf %19, %20 : vector<1x32x1xf32>
    %22 = math.rsqrt %21 : vector<1x32x1xf32>
    %23 = vector.shape_cast %2 : vector<32x1xf32> to vector<1x32x1xf32>
    %24 = arith.mulf %23, %22 : vector<1x32x1xf32>
    %25 = vector.shape_cast %4 : vector<32x1xf32> to vector<1x32x1xf32>
    %26 = arith.mulf %25, %10 : vector<1x32x1xf32>
    %27 = vector.shape_cast %6 : vector<32x1xf32> to vector<1x32x1xf32>
    %28 = arith.addf %27, %26 : vector<1x32x1xf32>
    %29 = arith.mulf %24, %10 : vector<1x32x1xf32>
    %30 = arith.subf %28, %29 : vector<1x32x1xf32>
    %31 = vector.broadcast %24 : vector<1x32x1xf32> to vector<1x32x256xf32>
    %32 = arith.mulf %31, %0 : vector<1x32x256xf32>
    %33 = vector.broadcast %30 : vector<1x32x1xf32> to vector<1x32x256xf32>
    %34 = arith.addf %32, %33 : vector<1x32x256xf32>
    %cst_14 = arith.constant 0.000000e+00 : f32
    %35 = vector.broadcast %cst_14 : f32 to vector<1x32x256xf32>
    %36 = arith.subf %35, %34 : vector<1x32x256xf32>
    %37 = math.exp %36 : vector<1x32x256xf32>
    %cst_15 = arith.constant 1.000000e+00 : f32
    %38 = vector.broadcast %cst_15 : f32 to vector<1x32x256xf32>
    %39 = arith.addf %38, %37 : vector<1x32x256xf32>
    %cst_16 = arith.constant 1.000000e+00 : f32
    %40 = vector.broadcast %cst_16 : f32 to vector<1x32x256xf32>
    %41 = arith.divf %40, %39 : vector<1x32x256xf32>
    %42 = arith.mulf %0, %41 : vector<1x32x256xf32>
    %c0_17 = arith.constant 0 : index
    %c0_18 = arith.constant 0 : index
    %c0_19 = arith.constant 0 : index
    %43 = vector.load %arg6[%c0_17, %c0_18, %c0_19] : memref<1x32x512xf32, #tpu.memory_space<vmem>>, vector<1x32x256xf32>
    tpu.vector_store %arg6[%c0_17, %c0_18, %c0_19], %42 {strides = array<i32>} : memref<1x32x512xf32, #tpu.memory_space<vmem>>, vector<1x32x256xf32>,
    %c0_20 = arith.constant 0 : index
    %c0_21 = arith.constant 0 : index
    %c0_22 = arith.constant 0 : index
    %44 = vector.load %arg3[%c0_20, %c0_21, %c0_22] : memref<1x32x256xf32, #tpu.memory_space<vmem>>, vector<1x32x256xf32>
    %c0_23 = arith.constant 0 : index
    %c0_24 = arith.constant 0 : index
    %c0_25 = arith.constant 0 : index
    %45 = vector.load %arg5[%c0_23, %c0_24, %c0_25] : memref<3x32x1xf32, #tpu.memory_space<vmem>>, vector<1x32x1xf32>
    %46 = vector.shape_cast %45 : vector<1x32x1xf32> to vector<32x1xf32>
    %c1_26 = arith.constant 1 : index
    %c0_27 = arith.constant 0 : index
    %c0_28 = arith.constant 0 : index
    %47 = vector.load %arg5[%c1_26, %c0_27, %c0_28] : memref<3x32x1xf32, #tpu.memory_space<vmem>>, vector<1x32x1xf32>
    %48 = vector.shape_cast %47 : vector<1x32x1xf32> to vector<32x1xf32>
    %c2_29 = arith.constant 2 : index
    %c0_30 = arith.constant 0 : index
    %c0_31 = arith.constant 0 : index
    %49 = vector.load %arg5[%c2_29, %c0_30, %c0_31] : memref<3x32x1xf32, #tpu.memory_space<vmem>>, vector<1x32x1xf32>
    %50 = vector.shape_cast %49 : vector<1x32x1xf32> to vector<32x1xf32>
    %cst_32 = arith.constant dense<0.000000e+00> : vector<1x32xf32>
    %51 = vector.multi_reduction <add>, %44, %cst_32 [2] : vector<1x32x256xf32> to vector<1x32xf32>
    %52 = vector.shape_cast %51 : vector<1x32xf32> to vector<1x32x1xf32>
    %cst_33 = arith.constant 3.906250e-03 : f32
    %53 = vector.broadcast %cst_33 : f32 to vector<1x32x1xf32>
    %54 = arith.mulf %52, %53 : vector<1x32x1xf32>
    %55 = arith.mulf %44, %44 : vector<1x32x256xf32>
    %cst_34 = arith.constant dense<0.000000e+00> : vector<1x32xf32>
    %56 = vector.multi_reduction <add>, %55, %cst_34 [2] : vector<1x32x256xf32> to vector<1x32xf32>
    %57 = vector.shape_cast %56 : vector<1x32xf32> to vector<1x32x1xf32>
    %cst_35 = arith.constant 3.906250e-03 : f32
    %58 = vector.broadcast %cst_35 : f32 to vector<1x32x1xf32>
    %59 = arith.mulf %57, %58 : vector<1x32x1xf32>
    %60 = arith.mulf %54, %54 : vector<1x32x1xf32>
    %61 = arith.subf %59, %60 : vector<1x32x1xf32>
    %cst_36 = arith.constant 0.000000e+00 : f32
    %62 = vector.broadcast %cst_36 : f32 to vector<1x32x1xf32>
    %63 = arith.maximumf %61, %62 : vector<1x32x1xf32>
    %cst_37 = arith.constant 9.99999974E-6 : f32
    %64 = vector.broadcast %cst_37 : f32 to vector<1x32x1xf32>
    %65 = arith.addf %63, %64 : vector<1x32x1xf32>
    %66 = math.rsqrt %65 : vector<1x32x1xf32>
    %67 = vector.shape_cast %46 : vector<32x1xf32> to vector<1x32x1xf32>
    %68 = arith.mulf %67, %66 : vector<1x32x1xf32>
    %69 = vector.shape_cast %48 : vector<32x1xf32> to vector<1x32x1xf32>
    %70 = arith.mulf %69, %54 : vector<1x32x1xf32>
    %71 = vector.shape_cast %50 : vector<32x1xf32> to vector<1x32x1xf32>
    %72 = arith.addf %71, %70 : vector<1x32x1xf32>
    %73 = arith.mulf %68, %54 : vector<1x32x1xf32>
    %74 = arith.subf %72, %73 : vector<1x32x1xf32>
    %75 = vector.broadcast %68 : vector<1x32x1xf32> to vector<1x32x256xf32>
    %76 = arith.mulf %75, %44 : vector<1x32x256xf32>
    %77 = vector.broadcast %74 : vector<1x32x1xf32> to vector<1x32x256xf32>
    %78 = arith.addf %76, %77 : vector<1x32x256xf32>
    %cst_38 = arith.constant 0.000000e+00 : f32
    %79 = vector.broadcast %cst_38 : f32 to vector<1x32x256xf32>
    %80 = arith.subf %79, %78 : vector<1x32x256xf32>
    %81 = math.exp %80 : vector<1x32x256xf32>
    %cst_39 = arith.constant 1.000000e+00 : f32
    %82 = vector.broadcast %cst_39 : f32 to vector<1x32x256xf32>
    %83 = arith.addf %82, %81 : vector<1x32x256xf32>
    %cst_40 = arith.constant 1.000000e+00 : f32
    %84 = vector.broadcast %cst_40 : f32 to vector<1x32x256xf32>
    %85 = arith.divf %84, %83 : vector<1x32x256xf32>
    %86 = arith.mulf %44, %85 : vector<1x32x256xf32>
    %c0_41 = arith.constant 0 : index
    %c0_42 = arith.constant 0 : index
    %c256 = arith.constant 256 : index
    %87 = vector.load %arg6[%c0_41, %c0_42, %c256] : memref<1x32x512xf32, #tpu.memory_space<vmem>>, vector<1x32x256xf32>
    tpu.vector_store %arg6[%c0_41, %c0_42, %c256], %86 {strides = array<i32>} : memref<1x32x512xf32, #tpu.memory_space<vmem>>, vector<1x32x256xf32>,
    return
  }
  func.func @transform_0(%arg0: i32, %arg1: i32) -> (i32, i32, i32) {
    %c0_i32 = arith.constant 0 : i32
    %c0_i32_0 = arith.constant 0 : i32
    return %arg1, %arg0, %c0_i32 : i32, i32, i32
  }
  func.func @transform_1(%arg0: i32, %arg1: i32) -> (i32, i32, i32) {
    %c1_i32 = arith.constant 1 : i32
    %0 = arith.addi %arg0, %c1_i32 : i32
    %c0_i32 = arith.constant 0 : i32
    %c0_i32_0 = arith.constant 0 : i32
    return %arg1, %0, %c0_i32 : i32, i32, i32
  }
  func.func @transform_2(%arg0: i32, %arg1: i32) -> (i32, i32, i32) {
    %c0_i32 = arith.constant 0 : i32
    %c0_i32_0 = arith.constant 0 : i32
    %c0_i32_1 = arith.constant 0 : i32
    return %c0_i32, %arg0, %c0_i32_0 : i32, i32, i32
  }
  func.func @transform_3(%arg0: i32, %arg1: i32) -> (i32, i32, i32) {
    %c0_i32 = arith.constant 0 : i32
    %c0_i32_0 = arith.constant 0 : i32
    %c0_i32_1 = arith.constant 0 : i32
    return %c0_i32, %arg0, %c0_i32_0 : i32, i32, i32
  }
  func.func @transform_4(%arg0: i32, %arg1: i32) -> (i32, i32, i32) {
    %c0_i32 = arith.constant 0 : i32
    %c0_i32_0 = arith.constant 0 : i32
    return %arg1, %arg0, %c0_i32 : i32, i32, i32
  }
}

</mosaic_0001>

<llo_original>
// kernel: tile.23
$region0: #{tile.23}
  #allocation0 [shape = 's32[1]{0}', space=sflag, size = 0x4, scoped, tag = 'scoped memory for tile.23']
  %s0 = inlined_call_operand.vmem [shape: f32[8], index: 0, kind: input, shape index: {}]
  %s1 = inlined_call_operand.vmem [shape: f32[8,8], index: 1, kind: output, shape index: {}]
  // Predicated region
  $region2: #{tile.23} parent=0 // pred_check
    _
  $region3: #{tile.23} parent=0 // pred_check_branch
    %3 = sbr.rel (0) target = $region5
  $region4: #{tile.23} parent=0 // pred_region
    _
  $region5: #{tile.23} parent=0 // pred_fallthru
    _
  %v4 = vld [vmem:[%s0] ss:$0 sm:$0xff]
  %5 = vst [vmem:[%s1] sm:$0xff] %v4

// kernel: tile.24
$region0: #{tile.24}
  %s0 = inlined_call_operand.vmem [shape: f32[8,8], index: 0, kind: input, shape index: {}]
  %s1 = inlined_call_operand.vmem [shape: f32[64], index: 1, kind: output, shape index: {}]
  $region1: #{tile.24} parent=0
    #allocation0 [shape = 'u8[4096]{0}', space=vmem, size = 0x1000, scoped, tag = 'scoped mem for output reshape']
    %v2 = vld [vmem:[%s0] sm:$0x1]
    %vm3 = vcmask 64512
    %4 = vst.msk [vmem:[#allocation0] sm:$0x1] %vm3, %v2
    %s5 = scalar_lea.vmem %s0, 7
    %v6 = vld [vmem:[%s5] sm:$0x1]
    %7 = vrot.lane.b32.xlu0 %v6, 56
    %v8 = vpop.permute.xlu0 %7
    %vm9 = vcmask 523712
    %10 = vst.msk [vmem:[#allocation0] sm:$0x1] %vm9, %v8
    %s11 = scalar_lea.vmem %s0, 6
    %v12 = vld [vmem:[%s11] sm:$0x1]
    %13 = vrot.lane.b32.xlu0 %v12, 48
    %v14 = vpop.permute.xlu0 %13
    %vm15 = vcmask 458112
    %16 = vst.msk [vmem:[#allocation0] sm:$0x1] %vm15, %v14
    %s17 = scalar_lea.vmem %s0, 5
    %v18 = vld [vmem:[%s17] sm:$0x1]
    %19 = vrot.lane.b32.xlu0 %v18, 40
    %v20 = vpop.permute.xlu0 %19
    %vm21 = vcmask 392512
    %22 = vst.msk [vmem:[#allocation0] sm:$0x1] %vm21, %v20
    %s23 = scalar_lea.vmem %s0, 4
    %v24 = vld [vmem:[%s23] sm:$0x1]
    %25 = vrot.lane.b32.xlu0 %v24, 32
    %v26 = vpop.permute.xlu0 %25
    %vm27 = vcmask 326912
    %28 = vst.msk [vmem:[#allocation0] sm:$0x1] %vm27, %v26
    %s29 = scalar_lea.vmem %s0, 3
    %v30 = vld [vmem:[%s29] sm:$0x1]
    %31 = vrot.lane.b32.xlu0 %v30, 24
    %v32 = vpop.permute.xlu0 %31
    %vm33 = vcmask 261312
    %34 = vst.msk [vmem:[#allocation0] sm:$0x1] %vm33, %v32
    %s35 = scalar_lea.vmem %s0, 2
    %v36 = vld [vmem:[%s35] sm:$0x1]
    %37 = vrot.lane.b32.xlu0 %v36, 16
    %v38 = vpop.permute.xlu0 %37
    %vm39 = vcmask 195712
    %40 = vst.msk [vmem:[#allocation0] sm:$0x1] %vm39, %v38
    %s41 = scalar_lea.vmem %s0, 1
    %v42 = vld [vmem:[%s41] sm:$0x1]
    %43 = vrot.lane.b32.xlu0 %v42, 8
    %v44 = vpop.permute.xlu0 %43
    %vm45 = vcmask 130112
    %46 = vst.msk [vmem:[#allocation0] sm:$0x1] %vm45, %v44
    %s48 = sshllo.u32 0, 1
    %v50 = vld [vmem:[#allocation0] sm:%s48]
    %s51 = sshllo.u32 0, 1
    %52 = vst [vmem:[%s1] sm:%s51] %v50

// kernel: shuffle_attention.1
$region0: #{shuffle_attention.1}
  #allocation0 [shape = 'u32[]', space=smem, size = 0x4, offset = 0x4, fixed_abs, tag = 'smem constant byte address 0x4 - core index']
  #allocation1 [shape = 'u32[144,128]{1,0:T(1,128)}', space=vmem, size = 0x12000, scoped, tag = 'internal scratch']
  %s0 = inlined_call_operand.vmem [shape: f32[2,64,256], index: 0, kind: input, shape index: {}, may-alias: {0,1}]
  %s1 = inlined_call_operand.vmem [shape: f32[2,64,256], index: 1, kind: input, shape index: {}, may-alias: {0,1}]
  %s2 = inlined_call_operand.vmem [shape: f32[3,32,1], index: 2, kind: input, shape index: {}]
  %s3 = inlined_call_operand.vmem [shape: f32[3,32,1], index: 3, kind: input, shape index: {}]
  %s4 = inlined_call_operand.vmem [shape: f32[2,32,512], index: 4, kind: output, shape index: {}]
  %s5 = sld [smem:[#allocation0]]
  $region49: #{shuffle_attention.1} parent=0
    _
  %s7 = ssub.s32 1, %s5
  %s8 = scalar_select 0, %s7, %s5
  loop: start=0, step=1, limit=4
  $region2: #{shuffle_attention.1} parent=0 // loop_pre_header
    _
  $region3: #{shuffle_attention.1} parent=0 // loop_header
    %s10 = sphi 0, %s14
    %p11 = scmp.ge.s32.totalorder %s10, 4
    %s17 = sphi 0, %s29
    %s18 = sphi 0, %s25
    %s19 = sphi 0, %s17
    %s20 = sphi 0, %s18
    %s21 = sphi 0, %s19
    %s22 = sphi 0, %s20
    %s34 = sphi 0, %s36
    %s37 = sphi 0, %s34
    %s38 = sphi 0, %s37
    %s54 = sphi 0, %s38
    %s64 = sphi 0, %s66
    %s67 = sphi 0, %s64
    %s68 = sphi 0, %s67
    %s84 = sphi 0, %s68
    %s90 = sphi 0, %s92
    %s93 = sphi 0, %s90
    %s94 = sphi 0, %s93
    %s110 = sphi 0, %s94
    %s116 = sphi 0, %s118
    %s119 = sphi 0, %s116
    %s120 = sphi 0, %s119
    %s136 = sphi 0, %s120
    %s144 = sphi 0, %s146
    %s147 = sphi 0, %s144
    %s148 = sphi 0, %s147
    %s164 = sphi 0, %s148
  $region4: #{shuffle_attention.1} parent=0 // loop_header_branch
    %13 = sbr.rel (%p11) target = $region8
  $region5: #{shuffle_attention.1} parent=0 // loop_body
    %s15 = ssub.s32 %s10, 1
    %s16 = ssub.s32 %s10, 2
    %s23 = sadd.s32 1, %s18
    %p24 = scmp.ge.s32.totalorder %s23, 2
    %s25 = scalar_select %p24, 0, %s23
    %s26 = sadd.s32 1, %s17
    %s27 = scalar_select %p24, %s26, %s17
    %p28 = scmp.ge.s32.totalorder %s27, 1
    %s29 = scalar_select %p28, 0, %s27
    %s30 = ssub.s32 %s18, %s25
    %s31 = ssub.s32 %s17, %s29
    %s32 = sor.u32 %s30, %s31
    %p33 = scmp.eq.s32.totalorder %s32, 0
    %s35 = sadd.s32 %s34, 1
    %s36 = scalar_select %p33, %s34, %s35
    %p39 = pneg %p33
    %p40 = scmp.eq.s32.totalorder %s10, 1
    %p41 = por %p39, %p40
    %p42 = scmp.ne.s32.totalorder %s34, %s37
    %p43 = scmp.eq.s32.totalorder %s10, 0
    %p44 = por %p42, %p43
    %p45 = scmp.ne.s32.totalorder %s34, %s37
    %p46 = scmp.eq.s32.totalorder %s15, 1
    %p47 = por %p45, %p46
    %p48 = scmp.ne.s32.totalorder %s37, %s38
    %p49 = scmp.eq.s32.totalorder %s15, 0
    %p50 = por %p48, %p49
    %p51 = scmp.ne.s32.totalorder %s37, %s38
    %p52 = scmp.eq.s32.totalorder %s16, 1
    %p53 = por %p51, %p52
    %p55 = scmp.ne.s32.totalorder %s38, %s54
    %p56 = scmp.eq.s32.totalorder %s16, 0
    %p57 = por %p55, %p56
    %s58 = sadd.s32 %s17, 1
    %s59 = sadd.s32 %s29, 1
    %s60 = ssub.s32 %s18, %s25
    %s61 = ssub.s32 %s58, %s59
    %s62 = sor.u32 %s60, %s61
    %p63 = scmp.eq.s32.totalorder %s62, 0
    %s65 = sadd.s32 %s64, 1
    %s66 = scalar_select %p63, %s64, %s65
    %p69 = pneg %p63
    %p70 = scmp.eq.s32.totalorder %s10, 1
    %p71 = por %p69, %p70
    %p72 = scmp.ne.s32.totalorder %s64, %s67
    %p73 = scmp.eq.s32.totalorder %s10, 0
    %p74 = por %p72, %p73
    %p75 = scmp.ne.s32.totalorder %s64, %s67
    %p76 = scmp.eq.s32.totalorder %s15, 1
    %p77 = por %p75, %p76
    %p78 = scmp.ne.s32.totalorder %s67, %s68
    %p79 = scmp.eq.s32.totalorder %s15, 0
    %p80 = por %p78, %p79
    %p81 = scmp.ne.s32.totalorder %s67, %s68
    %p82 = scmp.eq.s32.totalorder %s16, 1
    %p83 = por %p81, %p82
    %p85 = scmp.ne.s32.totalorder %s68, %s84
    %p86 = scmp.eq.s32.totalorder %s16, 0
    %p87 = por %p85, %p86
    %s88 = ssub.s32 %s17, %s29
    %p89 = scmp.eq.s32.totalorder %s88, 0
    %s91 = sadd.s32 %s90, 1
    %s92 = scalar_select %p89, %s90, %s91
    %p95 = pneg %p89
    %p96 = scmp.eq.s32.totalorder %s10, 1
    %p97 = por %p95, %p96
    %p98 = scmp.ne.s32.totalorder %s90, %s93
    %p99 = scmp.eq.s32.totalorder %s10, 0
    %p100 = por %p98, %p99
    %p101 = scmp.ne.s32.totalorder %s90, %s93
    %p102 = scmp.eq.s32.totalorder %s15, 1
    %p103 = por %p101, %p102
    %p104 = scmp.ne.s32.totalorder %s93, %s94
    %p105 = scmp.eq.s32.totalorder %s15, 0
    %p106 = por %p104, %p105
    %p107 = scmp.ne.s32.totalorder %s93, %s94
    %p108 = scmp.eq.s32.totalorder %s16, 1
    %p109 = por %p107, %p108
    %p111 = scmp.ne.s32.totalorder %s94, %s110
    %p112 = scmp.eq.s32.totalorder %s16, 0
    %p113 = por %p111, %p112
    %s114 = ssub.s32 %s17, %s29
    %p115 = scmp.eq.s32.totalorder %s114, 0
    %s117 = sadd.s32 %s116, 1
    %s118 = scalar_select %p115, %s116, %s117
    %p121 = pneg %p115
    %p122 = scmp.eq.s32.totalorder %s10, 1
    %p123 = por %p121, %p122
    %p124 = scmp.ne.s32.totalorder %s116, %s119
    %p125 = scmp.eq.s32.totalorder %s10, 0
    %p126 = por %p124, %p125
    %p127 = scmp.ne.s32.totalorder %s116, %s119
    %p128 = scmp.eq.s32.totalorder %s15, 1
    %p129 = por %p127, %p128
    %p130 = scmp.ne.s32.totalorder %s119, %s120
    %p131 = scmp.eq.s32.totalorder %s15, 0
    %p132 = por %p130, %p131
    %p133 = scmp.ne.s32.totalorder %s119, %s120
    %p134 = scmp.eq.s32.totalorder %s16, 1
    %p135 = por %p133, %p134
    %p137 = scmp.ne.s32.totalorder %s120, %s136
    %p138 = scmp.eq.s32.totalorder %s16, 0
    %p139 = por %p137, %p138
    %s140 = ssub.s32 %s18, %s25
    %s141 = ssub.s32 %s17, %s29
    %s142 = sor.u32 %s140, %s141
    %p143 = scmp.eq.s32.totalorder %s142, 0
    %s145 = sadd.s32 %s144, 1
    %s146 = scalar_select %p143, %s144, %s145
    %p149 = pneg %p143
    %p150 = scmp.eq.s32.totalorder %s10, 1
    %p151 = por %p149, %p150
    %p152 = scmp.ne.s32.totalorder %s144, %s147
    %p153 = scmp.eq.s32.totalorder %s10, 0
    %p154 = por %p152, %p153
    %p155 = scmp.ne.s32.totalorder %s144, %s147
    %p156 = scmp.eq.s32.totalorder %s15, 1
    %p157 = por %p155, %p156
    %p158 = scmp.ne.s32.totalorder %s147, %s148
    %p159 = scmp.eq.s32.totalorder %s15, 0
    %p160 = por %p158, %p159
    %p161 = scmp.ne.s32.totalorder %s147, %s148
    %p162 = scmp.eq.s32.totalorder %s16, 1
    %p163 = por %p161, %p162
    %p165 = scmp.ne.s32.totalorder %s148, %s164
    %p166 = scmp.eq.s32.totalorder %s16, 0
    %p167 = por %p165, %p166
    %p168 = scmp.le.s32.totalorder 1, %s10
    %p169 = scmp.lt.s32.totalorder %s10, 3
    %p170 = pnand %p168, %p169
    %p171 = pneg %p170
    // Predicated region
    $region9: #{shuffle_attention.1} parent=5 // pred_check
      _
    $region10: #{shuffle_attention.1} parent=5 // pred_check_branch
      %173 = sbr.rel (%p170) target = $region12
    $region11: #{shuffle_attention.1} parent=5 // pred_region
      %s174 = ssub.s32 %s10, 1
      // Predicated region
      $region13: #{shuffle_attention.1} parent=11 // pred_check
        %p175 = pneg %p106
      $region14: #{shuffle_attention.1} parent=11 // pred_check_branch
        %177 = sbr.rel (%p175) target = $region16
      $region15: #{shuffle_attention.1} parent=11 // pred_region
        %s178 = smul.u32 4, %s19
        %p179 = scmp.lt.s32.totalorder %s178, 3
        %s180 = scalar_select %p179, %s178, 3
        %s181 = smul.addr %s180, 8
        %s182 = scalar_lea.vmem %s2, %s181
        %s183 = smul.u32 4, %s19
      $region16: #{shuffle_attention.1} parent=11 // pred_fallthru
        _
      // Predicated region
      $region17: #{shuffle_attention.1} parent=11 // pred_check
        %p184 = pneg %p132
      $region18: #{shuffle_attention.1} parent=11 // pred_check_branch
        %186 = sbr.rel (%p184) target = $region20
      $region19: #{shuffle_attention.1} parent=11 // pred_region
        %s187 = smul.u32 4, %s19
        %p188 = scmp.lt.s32.totalorder %s187, 3
        %s189 = scalar_select %p188, %s187, 3
        %s190 = smul.addr %s189, 8
        %s191 = scalar_lea.vmem %s3, %s190
        %s192 = smul.u32 4, %s19
      $region20: #{shuffle_attention.1} parent=11 // pred_fallthru
        _
    $region12: #{shuffle_attention.1} parent=5 // pred_fallthru
      _
    %p193 = scmp.lt.s32.totalorder %s10, 2
    // Predicated region
    $region21: #{shuffle_attention.1} parent=5 // pred_check
      %p194 = pneg %p193
    $region22: #{shuffle_attention.1} parent=5 // pred_check_branch
      %196 = sbr.rel (%p194) target = $region24
    $region23: #{shuffle_attention.1} parent=5 // pred_region
      // Predicated region
      $region25: #{shuffle_attention.1} parent=23 // pred_check
        %p197 = pneg %p44
      $region26: #{shuffle_attention.1} parent=23 // pred_check_branch
        %199 = sbr.rel (%p197) target = $region28
      $region27: #{shuffle_attention.1} parent=23 // pred_region
        %s200 = smul.u32 4, %s17
        %p201 = scmp.lt.s32.totalorder %s18, 1
        %s202 = scalar_select %p201, %s18, 1
        %p203 = scmp.lt.s32.totalorder %s200, 7
        %s204 = scalar_select %p203, %s200, 7
        %s205 = smul.addr %s204, 2
        %s206 = smul.addr %s202, 16
        %s207 = sadd.s32 %s205, %s206
        %s208 = smul.addr %s207, 8
        %s209 = scalar_lea.vmem %s0, %s208
        %s210 = smul.u32 4, %s17
      $region28: #{shuffle_attention.1} parent=23 // pred_fallthru
        _
      // Predicated region
      $region29: #{shuffle_attention.1} parent=23 // pred_check
        %p211 = pneg %p74
      $region30: #{shuffle_attention.1} parent=23 // pred_check_branch
        %213 = sbr.rel (%p211) target = $region32
      $region31: #{shuffle_attention.1} parent=23 // pred_region
        %s214 = sadd.s32 %s17, 1
        %s215 = smul.u32 4, %s214
        %p216 = scmp.lt.s32.totalorder %s18, 1
        %s217 = scalar_select %p216, %s18, 1
        %p218 = scmp.lt.s32.totalorder %s215, 7
        %s219 = scalar_select %p218, %s215, 7
        %s220 = smul.addr %s219, 2
        %s221 = smul.addr %s217, 16
        %s222 = sadd.s32 %s220, %s221
        %s223 = smul.addr %s222, 8
        %s224 = scalar_lea.vmem %s1, %s223
        %s225 = sadd.s32 %s17, 1
        %s226 = smul.u32 4, %s225
      $region32: #{shuffle_attention.1} parent=23 // pred_fallthru
        _
    $region24: #{shuffle_attention.1} parent=5 // pred_fallthru
      _
    %p227 = scmp.le.s32.totalorder 1, %s10
    %p228 = scmp.lt.s32.totalorder %s10, 3
    %p229 = pnand %p227, %p228
    %p230 = pneg %p229
    // Predicated region
    $region33: #{shuffle_attention.1} parent=5 // pred_check
      _
    $region34: #{shuffle_attention.1} parent=5 // pred_check_branch
      %232 = sbr.rel (%p229) target = $region36
    $region35: #{shuffle_attention.1} parent=5 // pred_region
      %s233 = ssub.s32 %s10, 1
      %s234 = smul.u32 4, %s19
      %p235 = scmp.lt.s32.totalorder %s20, 1
      %s236 = scalar_select %p235, %s20, 1
      %p237 = scmp.lt.s32.totalorder %s234, 7
      %s238 = scalar_select %p237, %s234, 7
      %s239 = smul.addr %s238, 2
      %s240 = smul.addr %s236, 16
      %s241 = sadd.s32 %s239, %s240
      %s242 = smul.addr %s241, 8
      %s243 = scalar_lea.vmem %s0, %s242
      %p244 = pneg %p50
      %p245 = pneg %p47
      %s246 = sadd.s32 %s19, 1
      %s247 = smul.u32 4, %s246
      %p248 = scmp.lt.s32.totalorder %s20, 1
      %s249 = scalar_select %p248, %s20, 1
      %p250 = scmp.lt.s32.totalorder %s247, 7
      %s251 = scalar_select %p250, %s247, 7
      %s252 = smul.addr %s251, 2
      %s253 = smul.addr %s249, 16
      %s254 = sadd.s32 %s252, %s253
      %s255 = smul.addr %s254, 8
      %s256 = scalar_lea.vmem %s1, %s255
      %p257 = pneg %p80
      %p258 = pneg %p77
      %s259 = smul.u32 4, %s19
      %p260 = scmp.lt.s32.totalorder %s259, 3
      %s261 = scalar_select %p260, %s259, 3
      %s262 = smul.addr %s261, 8
      %s263 = scalar_lea.vmem %s2, %s262
      %p264 = pneg %p106
      %p265 = pneg %p103
      %s266 = smul.u32 4, %s19
      %p267 = scmp.lt.s32.totalorder %s266, 3
      %s268 = scalar_select %p267, %s266, 3
      %s269 = smul.addr %s268, 8
      %s270 = scalar_lea.vmem %s3, %s269
      %p271 = pneg %p132
      %p272 = pneg %p129
      %p273 = pneg %p160
      %p274 = pneg %p157
      %s275 = smul.u32 4, %s19
      %p276 = scmp.lt.s32.totalorder %s20, 1
      %s277 = scalar_select %p276, %s20, 1
      %p278 = scmp.lt.s32.totalorder %s275, 3
      %s279 = scalar_select %p278, %s275, 3
      %s280 = smul.addr %s279, 4
      %s281 = smul.addr %s277, 16
      %s282 = sadd.s32 %s280, %s281
      %s283 = smul.addr %s282, 8
      %s284 = scalar_lea.vmem %s4, %s283
      %s285 = smul.u32 4, %s19
      %p286 = scmp.lt.s32.totalorder %s20, 1
      %s287 = scalar_select %p286, %s20, 1
      %p288 = scmp.lt.s32.totalorder %s285, 7
      %s289 = scalar_select %p288, %s285, 7
      %s290 = smul.addr %s289, 2
      %s291 = smul.addr %s287, 16
      %s292 = sadd.s32 %s290, %s291
      %s293 = smul.addr %s292, 8
      %s294 = scalar_lea.vmem %s0, %s293
      %s295 = smul.u32 4, %s19
      %s296 = sadd.s32 %s19, 1
      %s297 = smul.u32 4, %s296
      %p298 = scmp.lt.s32.totalorder %s20, 1
      %s299 = scalar_select %p298, %s20, 1
      %p300 = scmp.lt.s32.totalorder %s297, 7
      %s301 = scalar_select %p300, %s297, 7
      %s302 = smul.addr %s301, 2
      %s303 = smul.addr %s299, 16
      %s304 = sadd.s32 %s302, %s303
      %s305 = smul.addr %s304, 8
      %s306 = scalar_lea.vmem %s1, %s305
      %s307 = sadd.s32 %s19, 1
      %s308 = smul.u32 4, %s307
      %s309 = smul.u32 4, %s19
      %p310 = scmp.lt.s32.totalorder %s309, 3
      %s311 = scalar_select %p310, %s309, 3
      %s312 = smul.addr %s311, 8
      %s313 = scalar_lea.vmem %s2, %s312
      %s314 = smul.u32 4, %s19
      %s315 = smul.u32 4, %s19
      %p316 = scmp.lt.s32.totalorder %s315, 3
      %s317 = scalar_select %p316, %s315, 3
      %s318 = smul.addr %s317, 8
      %s319 = scalar_lea.vmem %s3, %s318
      %s320 = smul.u32 4, %s19
      %s321 = smul.u32 4, %s19
      %p322 = scmp.lt.s32.totalorder %s20, 1
      %s323 = scalar_select %p322, %s20, 1
      %p324 = scmp.lt.s32.totalorder %s321, 3
      %s325 = scalar_select %p324, %s321, 3
      %s326 = smul.addr %s325, 4
      %s327 = smul.addr %s323, 16
      %s328 = sadd.s32 %s326, %s327
      %s329 = smul.addr %s328, 8
      %s330 = scalar_lea.vmem %s4, %s329
      %s331 = smul.u32 4, %s19
      %v332 = vld [vmem:[%s294] sm:$0xff]
      %v333 = vld [vmem:[%s294 + $0x8] sm:$0xff]
      %v334 = vld [vmem:[%s294 + $0x10] sm:$0xff]
      %v335 = vld [vmem:[%s294 + $0x18] sm:$0xff]
      %v336 = vld [vmem:[%s294 + $0x20] sm:$0xff]
      %v337 = vld [vmem:[%s294 + $0x28] sm:$0xff]
      %v338 = vld [vmem:[%s294 + $0x30] sm:$0xff]
      %v339 = vld [vmem:[%s294 + $0x38] sm:$0xff]
      %v340 = vld [vmem:[%s313] sm:$0xff]
      %v341 = vld [vmem:[%s313 + $0x8] sm:$0xff]
      %v342 = vld [vmem:[%s313 + $0x10] sm:$0xff]
      %v343 = vld [vmem:[%s313 + $0x18] sm:$0xff]
      %s344 = scalar_lea.vmem %s313, 32
      %v345 = vld [vmem:[%s344] sm:$0xff]
      %v346 = vld [vmem:[%s344 + $0x8] sm:$0xff]
      %v347 = vld [vmem:[%s344 + $0x10] sm:$0xff]
      %v348 = vld [vmem:[%s344 + $0x18] sm:$0xff]
      %s349 = scalar_lea.vmem %s313, 64
      %v350 = vld [vmem:[%s349] sm:$0xff]
      %v351 = vld [vmem:[%s349 + $0x8] sm:$0xff]
      %v352 = vld [vmem:[%s349 + $0x10] sm:$0xff]
      %v353 = vld [vmem:[%s349 + $0x18] sm:$0xff]
      %v354 = vadd.f32 %v332, %v333
      %355 = vadd.xlane.f32.xlu0 %v354
      %v356 = vpop.xlane.xlu0 %355
      %v357 = vadd.f32 %v334, %v335
      %358 = vadd.xlane.f32.xlu0 %v357
      %v359 = vpop.xlane.xlu0 %358
      %v360 = vadd.f32 %v336, %v337
      %361 = vadd.xlane.f32.xlu0 %v360
      %v362 = vpop.xlane.xlu0 %361
      %v363 = vadd.f32 %v338, %v339
      %364 = vadd.xlane.f32.xlu0 %v363
      %v365 = vpop.xlane.xlu0 %364
      %v366 = vmul.f32 %v356, 0.00390625
      %v367 = vmul.f32 %v359, 0.00390625
      %v368 = vmul.f32 %v362, 0.00390625
      %v369 = vmul.f32 %v365, 0.00390625
      %v370 = vmul.f32 %v332, %v332
      %v371 = vmul.f32 %v333, %v333
      %v372 = vmul.f32 %v334, %v334
      %v373 = vmul.f32 %v335, %v335
      %v374 = vmul.f32 %v336, %v336
      %v375 = vmul.f32 %v337, %v337
      %v376 = vmul.f32 %v338, %v338
      %v377 = vmul.f32 %v339, %v339
      %v378 = vadd.f32 %v370, %v371
      %379 = vadd.xlane.f32.xlu0 %v378
      %v380 = vpop.xlane.xlu0 %379
      %v381 = vadd.f32 %v372, %v373
      %382 = vadd.xlane.f32.xlu0 %v381
      %v383 = vpop.xlane.xlu0 %382
      %v384 = vadd.f32 %v374, %v375
      %385 = vadd.xlane.f32.xlu0 %v384
      %v386 = vpop.xlane.xlu0 %385
      %v387 = vadd.f32 %v376, %v377
      %388 = vadd.xlane.f32.xlu0 %v387
      %v389 = vpop.xlane.xlu0 %388
      %v390 = vmul.f32 %v380, 0.00390625
      %v391 = vmul.f32 %v383, 0.00390625
      %v392 = vmul.f32 %v386, 0.00390625
      %v393 = vmul.f32 %v389, 0.00390625
      %v394 = vmul.f32 %v366, %v366
      %v395 = vmul.f32 %v367, %v367
      %v396 = vmul.f32 %v368, %v368
      %v397 = vmul.f32 %v369, %v369
      %v398 = vsub.f32 %v390, %v394
      %v399 = vsub.f32 %v391, %v395
      %v400 = vsub.f32 %v392, %v396
      %v401 = vsub.f32 %v393, %v397
      %v402 = vmax.f32 %v398, 0.0
      %v403 = vmax.f32 %v399, 0.0
      %v404 = vmax.f32 %v400, 0.0
      %v405 = vmax.f32 %v401, 0.0
      %v406 = vadd.f32 %v402, 1e-05
      %v407 = vadd.f32 %v403, 1e-05
      %v408 = vadd.f32 %v404, 1e-05
      %v409 = vadd.f32 %v405, 1e-05
      %v410 = vrsqrt.pop %v406
      %v411 = vrsqrt.pop %v407
      %v412 = vrsqrt.pop %v408
      %v413 = vrsqrt.pop %v409
      %v414 = vmul.f32 %v340, %v410
      %v415 = vmul.f32 %v341, %v411
      %v416 = vmul.f32 %v342, %v412
      %v417 = vmul.f32 %v343, %v413
      %v418 = vmul.f32 %v345, %v366
      %v419 = vmul.f32 %v346, %v367
      %v420 = vmul.f32 %v347, %v368
      %v421 = vmul.f32 %v348, %v369
      %v422 = vadd.f32 %v350, %v418
      %v423 = vadd.f32 %v351, %v419
      %v424 = vadd.f32 %v352, %v420
      %v425 = vadd.f32 %v353, %v421
      %v426 = vmul.f32 %v414, %v366
      %v427 = vmul.f32 %v415, %v367
      %v428 = vmul.f32 %v416, %v368
      %v429 = vmul.f32 %v417, %v369
      %v430 = vsub.f32 %v422, %v426
      %v431 = vsub.f32 %v423, %v427
      %v432 = vsub.f32 %v424, %v428
      %v433 = vsub.f32 %v425, %v429
      %435 = vset.pattern.permute.xlu0 0
      %436 = vperm.xlu0 %435, %v414
      %v437 = vpop.permute.xlu0 %436
      %440 = vset.pattern.permute.xlu0 0
      %441 = vperm.xlu0 %440, %v415
      %v442 = vpop.permute.xlu0 %441
      %445 = vset.pattern.permute.xlu0 0
      %446 = vperm.xlu0 %445, %v416
      %v447 = vpop.permute.xlu0 %446
      %450 = vset.pattern.permute.xlu0 0
      %451 = vperm.xlu0 %450, %v417
      %v452 = vpop.permute.xlu0 %451
      %v454 = vmul.f32 %v437, %v332
      %v455 = vmul.f32 %v437, %v333
      %v456 = vmul.f32 %v442, %v334
      %v457 = vmul.f32 %v442, %v335
      %v458 = vmul.f32 %v447, %v336
      %v459 = vmul.f32 %v447, %v337
      %v460 = vmul.f32 %v452, %v338
      %v461 = vmul.f32 %v452, %v339
      %463 = vset.pattern.permute.xlu0 0
      %464 = vperm.xlu0 %463, %v430
      %v465 = vpop.permute.xlu0 %464
      %468 = vset.pattern.permute.xlu0 0
      %469 = vperm.xlu0 %468, %v431
      %v470 = vpop.permute.xlu0 %469
      %473 = vset.pattern.permute.xlu0 0
      %474 = vperm.xlu0 %473, %v432
      %v475 = vpop.permute.xlu0 %474
      %478 = vset.pattern.permute.xlu0 0
      %479 = vperm.xlu0 %478, %v433
      %v480 = vpop.permute.xlu0 %479
      %v482 = vadd.f32 %v454, %v465
      %v483 = vadd.f32 %v455, %v465
      %v484 = vadd.f32 %v456, %v470
      %v485 = vadd.f32 %v457, %v470
      %v486 = vadd.f32 %v458, %v475
      %v487 = vadd.f32 %v459, %v475
      %v488 = vadd.f32 %v460, %v480
      %v489 = vadd.f32 %v461, %v480
      %v490 = vsub.f32 0.0, %v482
      %v491 = vsub.f32 0.0, %v483
      %v492 = vsub.f32 0.0, %v484
      %v493 = vsub.f32 0.0, %v485
      %v494 = vsub.f32 0.0, %v486
      %v495 = vsub.f32 0.0, %v487
      %v496 = vsub.f32 0.0, %v488
      %v497 = vsub.f32 0.0, %v489
      %v498 = vmul.f32 %v490, 1.442695
      %v499 = vpow.pop %v498
      %v500 = vmul.f32 %v491, 1.442695
      %v501 = vpow.pop %v500
      %v502 = vmul.f32 %v492, 1.442695
      %v503 = vpow.pop %v502
      %v504 = vmul.f32 %v493, 1.442695
      %v505 = vpow.pop %v504
      %v506 = vmul.f32 %v494, 1.442695
      %v507 = vpow.pop %v506
      %v508 = vmul.f32 %v495, 1.442695
      %v509 = vpow.pop %v508
      %v510 = vmul.f32 %v496, 1.442695
      %v511 = vpow.pop %v510
      %v512 = vmul.f32 %v497, 1.442695
      %v513 = vpow.pop %v512
      %v514 = vadd.f32 %v499, 1.0
      %v515 = vadd.f32 %v501, 1.0
      %v516 = vadd.f32 %v503, 1.0
      %v517 = vadd.f32 %v505, 1.0
      %v518 = vadd.f32 %v507, 1.0
      %v519 = vadd.f32 %v509, 1.0
      %v520 = vadd.f32 %v511, 1.0
      %v521 = vadd.f32 %v513, 1.0
      %v522 = vrcp.pop %v514
      %v523 = vmul.f32 1.0, %v522
      %v524 = vrcp.pop %v515
      %v525 = vmul.f32 1.0, %v524
      %v526 = vrcp.pop %v516
      %v527 = vmul.f32 1.0, %v526
      %v528 = vrcp.pop %v517
      %v529 = vmul.f32 1.0, %v528
      %v530 = vrcp.pop %v518
      %v531 = vmul.f32 1.0, %v530
      %v532 = vrcp.pop %v519
      %v533 = vmul.f32 1.0, %v532
      %v534 = vrcp.pop %v520
      %v535 = vmul.f32 1.0, %v534
      %v536 = vrcp.pop %v521
      %v537 = vmul.f32 1.0, %v536
      %v538 = vmul.f32 %v332, %v523
      %v539 = vmul.f32 %v333, %v525
      %v540 = vmul.f32 %v334, %v527
      %v541 = vmul.f32 %v335, %v529
      %v542 = vmul.f32 %v336, %v531
      %v543 = vmul.f32 %v337, %v533
      %v544 = vmul.f32 %v338, %v535
      %v545 = vmul.f32 %v339, %v537
      %546 = vst [vmem:[%s330] sm:$0xff] %v538
      %547 = vst [vmem:[%s330 + $0x8] sm:$0xff] %v539
      %548 = vst [vmem:[%s330 + $0x20] sm:$0xff] %v540
      %549 = vst [vmem:[%s330 + $0x28] sm:$0xff] %v541
      %550 = vst [vmem:[%s330 + $0x40] sm:$0xff] %v542
      %551 = vst [vmem:[%s330 + $0x48] sm:$0xff] %v543
      %552 = vst [vmem:[%s330 + $0x60] sm:$0xff] %v544
      %553 = vst [vmem:[%s330 + $0x68] sm:$0xff] %v545
      %v554 = vld [vmem:[%s306] sm:$0xff]
      %v555 = vld [vmem:[%s306 + $0x8] sm:$0xff]
      %v556 = vld [vmem:[%s306 + $0x10] sm:$0xff]
      %v557 = vld [vmem:[%s306 + $0x18] sm:$0xff]
      %v558 = vld [vmem:[%s306 + $0x20] sm:$0xff]
      %v559 = vld [vmem:[%s306 + $0x28] sm:$0xff]
      %v560 = vld [vmem:[%s306 + $0x30] sm:$0xff]
      %v561 = vld [vmem:[%s306 + $0x38] sm:$0xff]
      %v562 = vld [vmem:[%s319] sm:$0xff]
      %v563 = vld [vmem:[%s319 + $0x8] sm:$0xff]
      %v564 = vld [vmem:[%s319 + $0x10] sm:$0xff]
      %v565 = vld [vmem:[%s319 + $0x18] sm:$0xff]
      %s566 = scalar_lea.vmem %s319, 32
      %v567 = vld [vmem:[%s566] sm:$0xff]
      %v568 = vld [vmem:[%s566 + $0x8] sm:$0xff]
      %v569 = vld [vmem:[%s566 + $0x10] sm:$0xff]
      %v570 = vld [vmem:[%s566 + $0x18] sm:$0xff]
      %s571 = scalar_lea.vmem %s319, 64
      %v572 = vld [vmem:[%s571] sm:$0xff]
      %v573 = vld [vmem:[%s571 + $0x8] sm:$0xff]
      %v574 = vld [vmem:[%s571 + $0x10] sm:$0xff]
      %v575 = vld [vmem:[%s571 + $0x18] sm:$0xff]
      %v576 = vadd.f32 %v554, %v555
      %577 = vadd.xlane.f32.xlu0 %v576
      %v578 = vpop.xlane.xlu0 %577
      %v579 = vadd.f32 %v556, %v557
      %580 = vadd.xlane.f32.xlu0 %v579
      %v581 = vpop.xlane.xlu0 %580
      %v582 = vadd.f32 %v558, %v559
      %583 = vadd.xlane.f32.xlu0 %v582
      %v584 = vpop.xlane.xlu0 %583
      %v585 = vadd.f32 %v560, %v561
      %586 = vadd.xlane.f32.xlu0 %v585
      %v587 = vpop.xlane.xlu0 %586
      %v588 = vmul.f32 %v578, 0.00390625
      %v589 = vmul.f32 %v581, 0.00390625
      %v590 = vmul.f32 %v584, 0.00390625
      %v591 = vmul.f32 %v587, 0.00390625
      %v592 = vmul.f32 %v554, %v554
      %v593 = vmul.f32 %v555, %v555
      %v594 = vmul.f32 %v556, %v556
      %v595 = vmul.f32 %v557, %v557
      %v596 = vmul.f32 %v558, %v558
      %v597 = vmul.f32 %v559, %v559
      %v598 = vmul.f32 %v560, %v560
      %v599 = vmul.f32 %v561, %v561
      %v600 = vadd.f32 %v592, %v593
      %601 = vadd.xlane.f32.xlu0 %v600
      %v602 = vpop.xlane.xlu0 %601
      %v603 = vadd.f32 %v594, %v595
      %604 = vadd.xlane.f32.xlu0 %v603
      %v605 = vpop.xlane.xlu0 %604
      %v606 = vadd.f32 %v596, %v597
      %607 = vadd.xlane.f32.xlu0 %v606
      %v608 = vpop.xlane.xlu0 %607
      %v609 = vadd.f32 %v598, %v599
      %610 = vadd.xlane.f32.xlu0 %v609
      %v611 = vpop.xlane.xlu0 %610
      %v612 = vmul.f32 %v602, 0.00390625
      %v613 = vmul.f32 %v605, 0.00390625
      %v614 = vmul.f32 %v608, 0.00390625
      %v615 = vmul.f32 %v611, 0.00390625
      %v616 = vmul.f32 %v588, %v588
      %v617 = vmul.f32 %v589, %v589
      %v618 = vmul.f32 %v590, %v590
      %v619 = vmul.f32 %v591, %v591
      %v620 = vsub.f32 %v612, %v616
      %v621 = vsub.f32 %v613, %v617
      %v622 = vsub.f32 %v614, %v618
      %v623 = vsub.f32 %v615, %v619
      %v624 = vmax.f32 %v620, 0.0
      %v625 = vmax.f32 %v621, 0.0
      %v626 = vmax.f32 %v622, 0.0
      %v627 = vmax.f32 %v623, 0.0
      %v628 = vadd.f32 %v624, 1e-05
      %v629 = vadd.f32 %v625, 1e-05
      %v630 = vadd.f32 %v626, 1e-05
      %v631 = vadd.f32 %v627, 1e-05
      %v632 = vrsqrt.pop %v628
      %v633 = vrsqrt.pop %v629
      %v634 = vrsqrt.pop %v630
      %v635 = vrsqrt.pop %v631
      %v636 = vmul.f32 %v562, %v632
      %v637 = vmul.f32 %v563, %v633
      %v638 = vmul.f32 %v564, %v634
      %v639 = vmul.f32 %v565, %v635
      %v640 = vmul.f32 %v567, %v588
      %v641 = vmul.f32 %v568, %v589
      %v642 = vmul.f32 %v569, %v590
      %v643 = vmul.f32 %v570, %v591
      %v644 = vadd.f32 %v572, %v640
      %v645 = vadd.f32 %v573, %v641
      %v646 = vadd.f32 %v574, %v642
      %v647 = vadd.f32 %v575, %v643
      %v648 = vmul.f32 %v636, %v588
      %v649 = vmul.f32 %v637, %v589
      %v650 = vmul.f32 %v638, %v590
      %v651 = vmul.f32 %v639, %v591
      %v652 = vsub.f32 %v644, %v648
      %v653 = vsub.f32 %v645, %v649
      %v654 = vsub.f32 %v646, %v650
      %v655 = vsub.f32 %v647, %v651
      %657 = vset.pattern.permute.xlu0 0
      %658 = vperm.xlu0 %657, %v636
      %v659 = vpop.permute.xlu0 %658
      %662 = vset.pattern.permute.xlu0 0
      %663 = vperm.xlu0 %662, %v637
      %v664 = vpop.permute.xlu0 %663
      %667 = vset.pattern.permute.xlu0 0
      %668 = vperm.xlu0 %667, %v638
      %v669 = vpop.permute.xlu0 %668
      %672 = vset.pattern.permute.xlu0 0
      %673 = vperm.xlu0 %672, %v639
      %v674 = vpop.permute.xlu0 %673
      %v676 = vmul.f32 %v659, %v554
      %v677 = vmul.f32 %v659, %v555
      %v678 = vmul.f32 %v664, %v556
      %v679 = vmul.f32 %v664, %v557
      %v680 = vmul.f32 %v669, %v558
      %v681 = vmul.f32 %v669, %v559
      %v682 = vmul.f32 %v674, %v560
      %v683 = vmul.f32 %v674, %v561
      %685 = vset.pattern.permute.xlu0 0
      %686 = vperm.xlu0 %685, %v652
      %v687 = vpop.permute.xlu0 %686
      %690 = vset.pattern.permute.xlu0 0
      %691 = vperm.xlu0 %690, %v653
      %v692 = vpop.permute.xlu0 %691
      %695 = vset.pattern.permute.xlu0 0
      %696 = vperm.xlu0 %695, %v654
      %v697 = vpop.permute.xlu0 %696
      %700 = vset.pattern.permute.xlu0 0
      %701 = vperm.xlu0 %700, %v655
      %v702 = vpop.permute.xlu0 %701
      %v704 = vadd.f32 %v676, %v687
      %v705 = vadd.f32 %v677, %v687
      %v706 = vadd.f32 %v678, %v692
      %v707 = vadd.f32 %v679, %v692
      %v708 = vadd.f32 %v680, %v697
      %v709 = vadd.f32 %v681, %v697
      %v710 = vadd.f32 %v682, %v702
      %v711 = vadd.f32 %v683, %v702
      %v712 = vsub.f32 0.0, %v704
      %v713 = vsub.f32 0.0, %v705
      %v714 = vsub.f32 0.0, %v706
      %v715 = vsub.f32 0.0, %v707
      %v716 = vsub.f32 0.0, %v708
      %v717 = vsub.f32 0.0, %v709
      %v718 = vsub.f32 0.0, %v710
      %v719 = vsub.f32 0.0, %v711
      %v720 = vmul.f32 %v712, 1.442695
      %v721 = vpow.pop %v720
      %v722 = vmul.f32 %v713, 1.442695
      %v723 = vpow.pop %v722
      %v724 = vmul.f32 %v714, 1.442695
      %v725 = vpow.pop %v724
      %v726 = vmul.f32 %v715, 1.442695
      %v727 = vpow.pop %v726
      %v728 = vmul.f32 %v716, 1.442695
      %v729 = vpow.pop %v728
      %v730 = vmul.f32 %v717, 1.442695
      %v731 = vpow.pop %v730
      %v732 = vmul.f32 %v718, 1.442695
      %v733 = vpow.pop %v732
      %v734 = vmul.f32 %v719, 1.442695
      %v735 = vpow.pop %v734
      %v736 = vadd.f32 %v721, 1.0
      %v737 = vadd.f32 %v723, 1.0
      %v738 = vadd.f32 %v725, 1.0
      %v739 = vadd.f32 %v727, 1.0
      %v740 = vadd.f32 %v729, 1.0
      %v741 = vadd.f32 %v731, 1.0
      %v742 = vadd.f32 %v733, 1.0
      %v743 = vadd.f32 %v735, 1.0
      %v744 = vrcp.pop %v736
      %v745 = vmul.f32 1.0, %v744
      %v746 = vrcp.pop %v737
      %v747 = vmul.f32 1.0, %v746
      %v748 = vrcp.pop %v738
      %v749 = vmul.f32 1.0, %v748
      %v750 = vrcp.pop %v739
      %v751 = vmul.f32 1.0, %v750
      %v752 = vrcp.pop %v740
      %v753 = vmul.f32 1.0, %v752
      %v754 = vrcp.pop %v741
      %v755 = vmul.f32 1.0, %v754
      %v756 = vrcp.pop %v742
      %v757 = vmul.f32 1.0, %v756
      %v758 = vrcp.pop %v743
      %v759 = vmul.f32 1.0, %v758
      %v760 = vmul.f32 %v554, %v745
      %v761 = vmul.f32 %v555, %v747
      %v762 = vmul.f32 %v556, %v749
      %v763 = vmul.f32 %v557, %v751
      %v764 = vmul.f32 %v558, %v753
      %v765 = vmul.f32 %v559, %v755
      %v766 = vmul.f32 %v560, %v757
      %v767 = vmul.f32 %v561, %v759
      %768 = vst [vmem:[%s330 + $0x10] sm:$0xff] %v760
      %769 = vst [vmem:[%s330 + $0x18] sm:$0xff] %v761
      %770 = vst [vmem:[%s330 + $0x30] sm:$0xff] %v762
      %771 = vst [vmem:[%s330 + $0x38] sm:$0xff] %v763
      %772 = vst [vmem:[%s330 + $0x50] sm:$0xff] %v764
      %773 = vst [vmem:[%s330 + $0x58] sm:$0xff] %v765
      %774 = vst [vmem:[%s330 + $0x70] sm:$0xff] %v766
      %775 = vst [vmem:[%s330 + $0x78] sm:$0xff] %v767
      %s776 = smul.u32 4, %s19
      %p777 = scmp.lt.s32.totalorder %s20, 1
      %s778 = scalar_select %p777, %s20, 1
      %p779 = scmp.lt.s32.totalorder %s776, 3
      %s780 = scalar_select %p779, %s776, 3
      %s781 = smul.addr %s780, 4
      %s782 = smul.addr %s778, 16
      %s783 = sadd.s32 %s781, %s782
      %s784 = smul.addr %s783, 8
      %s785 = scalar_lea.vmem %s4, %s784
      // Predicated region
      $region37: #{shuffle_attention.1} parent=35 // pred_check
        %p786 = pneg %p157
      $region38: #{shuffle_attention.1} parent=35 // pred_check_branch
        %788 = sbr.rel (%p786) target = $region40
      $region39: #{shuffle_attention.1} parent=35 // pred_region
        %s789 = smul.u32 4, %s19
      $region40: #{shuffle_attention.1} parent=35 // pred_fallthru
        _
    $region36: #{shuffle_attention.1} parent=5 // pred_fallthru
      _
    %p790 = scmp.le.s32.totalorder 2, %s10
    // Predicated region
    $region41: #{shuffle_attention.1} parent=5 // pred_check
      %p791 = pneg %p790
    $region42: #{shuffle_attention.1} parent=5 // pred_check_branch
      %793 = sbr.rel (%p791) target = $region44
    $region43: #{shuffle_attention.1} parent=5 // pred_region
      %s794 = ssub.s32 %s10, 2
      // Predicated region
      $region45: #{shuffle_attention.1} parent=43 // pred_check
        %p795 = pneg %p163
      $region46: #{shuffle_attention.1} parent=43 // pred_check_branch
        %797 = sbr.rel (%p795) target = $region48
      $region47: #{shuffle_attention.1} parent=43 // pred_region
        %s798 = smul.u32 4, %s21
        %p799 = scmp.lt.s32.totalorder %s22, 1
        %s800 = scalar_select %p799, %s22, 1
        %p801 = scmp.lt.s32.totalorder %s798, 3
        %s802 = scalar_select %p801, %s798, 3
        %s803 = smul.addr %s802, 4
        %s804 = smul.addr %s800, 16
        %s805 = sadd.s32 %s803, %s804
        %s806 = smul.addr %s805, 8
        %s807 = scalar_lea.vmem %s4, %s806
      $region48: #{shuffle_attention.1} parent=43 // pred_fallthru
        _
    $region44: #{shuffle_attention.1} parent=5 // pred_fallthru
      _
  $region6: #{shuffle_attention.1} parent=0 // loop_footer
    %s14 = sadd.s32 1, %s10
  $region7: #{shuffle_attention.1} parent=0 // loop_footer_branch
    %9 = sbr.rel target = $region3
  $region8: #{shuffle_attention.1} parent=0 // loop_exit
    _

</llo_original>
